<compile_context>
chip_gen: v5e
topology: v5e:2x2
jax: 0.10.0
libtpu: 0.0.40
codegen_flags: <defaults>
</compile_context>

<pallas_src>
import functools

import numpy as np
import jax
import jax.numpy as jnp
from jax.experimental import pallas as pl
from jax.experimental.pallas import tpu as pltpu


# ---------------------------------------------------------------------------
# In-kernel math helpers
# ---------------------------------------------------------------------------

_SQRT1_2 = 0.7071067811865476


def _erf(x):
    # Abramowitz & Stegun 7.1.26 polynomial approximation (max abs err ~1.5e-7).
    a1, a2, a3, a4, a5 = (0.254829592, -0.284496736, 1.421413741,
                          -1.453152027, 1.061405429)
    pp = 0.3275911
    sgn = jnp.where(x < 0.0, -1.0, 1.0)
    ax = jnp.abs(x)
    t = 1.0 / (1.0 + pp * ax)
    poly = ((((a5 * t + a4) * t + a3) * t + a2) * t + a1) * t
    return sgn * (1.0 - poly * jnp.exp(-ax * ax))


def _gelu(x):
    # Exact (erf-based) GELU, matching torch.nn.GELU().
    return 0.5 * x * (1.0 + _erf(x * _SQRT1_2))


# ---------------------------------------------------------------------------
# Kernel 1: generic dense  y = x @ W + b
# ---------------------------------------------------------------------------

def _dense_kernel(x_ref, w_ref, b_ref, o_ref):
    y = jnp.dot(x_ref[...], w_ref[...], preferred_element_type=jnp.float32)
    o_ref[...] = (y + b_ref[...]).astype(o_ref.dtype)


def pallas_dense(x, w, b, *, row_tile=512):
    """Applies y = x @ w + b over the last axis of x.  w: (K, N), b: (N,)."""
    lead = x.shape[:-1]
    K = x.shape[-1]
    N = w.shape[1]
    M = int(np.prod(lead)) if lead else 1
    x2 = x.reshape(M, K)
    b2 = b.reshape(1, N)
    tm = M if M <= row_tile else row_tile   # full rows when small, else 8-aligned tile
    grid = (pl.cdiv(M, tm),)
    out = pl.pallas_call(
        _dense_kernel,
        out_shape=jax.ShapeDtypeStruct((M, N), x.dtype),
        grid_spec=pltpu.PrefetchScalarGridSpec(
            num_scalar_prefetch=0,
            grid=grid,
            in_specs=[
                pl.BlockSpec((tm, K), lambda i: (i, 0)),
                pl.BlockSpec((K, N), lambda i: (0, 0)),
                pl.BlockSpec((1, N), lambda i: (0, 0)),
            ],
            out_specs=pl.BlockSpec((tm, N), lambda i: (i, 0)),
        ),
        compiler_params=pltpu.CompilerParams(
            dimension_semantics=("parallel",)),
    )(x2, w, b2)
    return out.reshape(*lead, N)


# ---------------------------------------------------------------------------
# Kernel 2: grouped residual GELU-MLP (channelcl / patchnumcl / timecl)
# ---------------------------------------------------------------------------

def _group_mixer_kernel(x_ref, w1_ref, b1_ref, w2_ref, b2_ref, o_ref):
    x = x_ref[0]                                              # (M, K)
    h = jnp.dot(x, w1_ref[0], preferred_element_type=jnp.float32) + b1_ref[0]
    h = _gelu(h)
    y = jnp.dot(h, w2_ref[0], preferred_element_type=jnp.float32) + b2_ref[0]
    o_ref[0] = y + x                                          # residual


def pallas_group_mixer(x, w1, b1, w2, b2):
    """out[g] = gelu(x[g] @ w1[g] + b1[g]) @ w2[g] + b2[g] + x[g]."""
    G, M, K = x.shape
    return pl.pallas_call(
        _group_mixer_kernel,
        out_shape=jax.ShapeDtypeStruct((G, M, K), x.dtype),
        grid_spec=pltpu.PrefetchScalarGridSpec(
            num_scalar_prefetch=0,
            grid=(G,),
            in_specs=[
                pl.BlockSpec((1, M, K), lambda g: (g, 0, 0)),
                pl.BlockSpec((1, K, K), lambda g: (g, 0, 0)),
                pl.BlockSpec((1, 1, K), lambda g: (g, 0, 0)),
                pl.BlockSpec((1, K, K), lambda g: (g, 0, 0)),
                pl.BlockSpec((1, 1, K), lambda g: (g, 0, 0)),
            ],
            out_specs=pl.BlockSpec((1, M, K), lambda g: (g, 0, 0)),
        ),
        compiler_params=pltpu.CompilerParams(
            dimension_semantics=("parallel",)),
    )(x, w1, b1.reshape(G, 1, K), w2, b2.reshape(G, 1, K))


# ---------------------------------------------------------------------------
# Kernel 3: fused Flatten_Head (3 residual GELU linears + projection)
# ---------------------------------------------------------------------------

def _head_kernel(x_ref, w1_ref, b1_ref, w2_ref, b2_ref, w3_ref, b3_ref,
                 w4_ref, b4_ref, o_ref):
    x = x_ref[...]
    for w_ref, b_ref in ((w1_ref, b1_ref), (w2_ref, b2_ref), (w3_ref, b3_ref)):
        x = _gelu(jnp.dot(x, w_ref[...], preferred_element_type=jnp.float32)
                  + b_ref[...]) + x
    o_ref[...] = (jnp.dot(x, w4_ref[...], preferred_element_type=jnp.float32)
                  + b4_ref[...]).astype(o_ref.dtype)


def pallas_flatten_head(x, w1, b1, w2, b2, w3, b3, w4, b4, *, row_tile=512):
    lead = x.shape[:-1]
    nf = x.shape[-1]
    T = w4.shape[1]
    M = int(np.prod(lead)) if lead else 1
    x2 = x.reshape(M, nf)
    tm = M if M <= row_tile else row_tile
    grid = (pl.cdiv(M, tm),)
    full = lambda i: (0, 0)
    out = pl.pallas_call(
        _head_kernel,
        out_shape=jax.ShapeDtypeStruct((M, T), x.dtype),
        grid_spec=pltpu.PrefetchScalarGridSpec(
            num_scalar_prefetch=0,
            grid=grid,
            in_specs=[
                pl.BlockSpec((tm, nf), lambda i: (i, 0)),
                pl.BlockSpec((nf, nf), full), pl.BlockSpec((1, nf), full),
                pl.BlockSpec((nf, nf), full), pl.BlockSpec((1, nf), full),
                pl.BlockSpec((nf, nf), full), pl.BlockSpec((1, nf), full),
                pl.BlockSpec((nf, T), full), pl.BlockSpec((1, T), full),
            ],
            out_specs=pl.BlockSpec((tm, T), lambda i: (i, 0)),
        ),
        compiler_params=pltpu.CompilerParams(
            dimension_semantics=("parallel",)),
    )(x2, w1, b1.reshape(1, nf), w2, b2.reshape(1, nf),
      w3, b3.reshape(1, nf), w4, b4.reshape(1, T))
    return out.reshape(*lead, T)


# ---------------------------------------------------------------------------
# Parameters (mimicking nn.Linear init; weights stored as (in, out))
# ---------------------------------------------------------------------------

class Config:
    seq_len = 16
    patch_len = 4
    stride = 4
    d_model = 32
    enc_in = 4
    pred_len = 8
    dropout = 0.0
    task_name = "long_term_forecast"
    use_statistic = False


def _linear(key, in_f, out_f):
    kw, kb = jax.random.split(key)
    bound = 1.0 / float(np.sqrt(in_f))
    w = jax.random.uniform(kw, (in_f, out_f), jnp.float32, -bound, bound)
    b = jax.random.uniform(kb, (out_f,), jnp.float32, -bound, bound)
    return w, b


def _grouped_linear(key, groups, in_f, out_f):
    ws, bs = [], []
    for k in jax.random.split(key, groups):
        w, b = _linear(k, in_f, out_f)
        ws.append(w)
        bs.append(b)
    return jnp.stack(ws), jnp.stack(bs)


def init_params(key, cfg):
    pnf = int((cfg.seq_len - cfg.patch_len) / cfg.stride + 1)
    nf = cfg.d_model * pnf
    keys = iter(jax.random.split(key, 24))
    p = {}
    p["seqdiv_w"], p["seqdiv_b"] = _linear(next(keys), 2 * cfg.patch_len, cfg.patch_len)
    p["proj_w"], p["proj_b"] = _linear(next(keys), cfg.patch_len, cfg.d_model)
    p["pos_embedf"] = 0.01 * jax.random.normal(next(keys), (pnf, cfg.d_model), jnp.float32)
    p["t_w1"], p["t_b1"] = _grouped_linear(next(keys), cfg.d_model, pnf, pnf)
    p["t_w2"], p["t_b2"] = _grouped_linear(next(keys), cfg.d_model, pnf, pnf)
    p["c_w1"], p["c_b1"] = _grouped_linear(next(keys), cfg.enc_in, cfg.d_model, cfg.d_model)
    p["c_w2"], p["c_b2"] = _grouped_linear(next(keys), cfg.enc_in, cfg.d_model, cfg.d_model)
    p["p_w1"], p["p_b1"] = _grouped_linear(next(keys), pnf, cfg.d_model, cfg.d_model)
    p["p_w2"], p["p_b2"] = _grouped_linear(next(keys), pnf, cfg.d_model, cfg.d_model)
    p["lts_w"], p["lts_b"] = _linear(next(keys), nf, cfg.seq_len)
    p["breakn_w"], p["breakn_b"] = _linear(next(keys), cfg.d_model, cfg.d_model)
    p["h_w1"], p["h_b1"] = _linear(next(keys), nf, nf)
    p["h_w2"], p["h_b2"] = _linear(next(keys), nf, nf)
    p["h_w3"], p["h_b3"] = _linear(next(keys), nf, nf)
    p["h_w4"], p["h_b4"] = _linear(next(keys), nf, cfg.seq_len)
    p["dsd_w"], p["dsd_b"] = _linear(next(keys), 2 * cfg.seq_len, cfg.seq_len)
    p["wout_w"], p["wout_b"] = _linear(next(keys), cfg.seq_len, cfg.pred_len)
    return p


# ---------------------------------------------------------------------------
# TFPMixerformer forward (Pallas)
# ---------------------------------------------------------------------------

def tfpmixer_forward(z, p, cfg):
    B, C, L = z.shape
    patch_len, stride = cfg.patch_len, cfg.stride
    pnf = int((L - patch_len) / stride + 1)
    H = cfg.d_model

    # --- instance normalization (forecast / anomaly path) -------------------
    z_mean = jnp.mean(z, axis=-1, keepdims=True)
    z_std = jnp.std(z, axis=-1, keepdims=True, ddof=1)     # torch.std (unbiased)
    zn = (z - z_mean) / (z_std + 1e-4)

    # --- torch.fft.fft(z) as an exact DFT matmul (Pallas dense, no bias) ----
    n = jnp.arange(L)
    ang = (2.0 * jnp.pi / L) * jnp.mod(jnp.outer(n, n), L).astype(jnp.float32)
    dft_re = jnp.cos(ang)
    dft_im = -jnp.sin(ang)
    zero_L = jnp.zeros((L,), jnp.float32)
    z1 = pallas_dense(zn, dft_re, zero_L)                  # Re(fft)
    z2 = pallas_dense(zn, dft_im, zero_L)                  # Im(fft)

    # --- unfold into patches + frequency-branch projection ------------------
    idx = stride * jnp.arange(pnf)[:, None] + jnp.arange(patch_len)[None, :]
    f = jnp.concatenate([z1[..., idx], z2[..., idx]], axis=-1)  # (B,C,pnf,2*pl)
    f = pallas_dense(f, p["seqdiv_w"], p["seqdiv_b"])           # (B,C,pnf,pl)
    zcube = zn[..., idx]                                        # (B,C,pnf,pl)

    z_embed = pallas_dense(zcube, p["proj_w"], p["proj_b"]) + p["pos_embedf"]
    f_embed = pallas_dense(f, p["proj_w"], p["proj_b"]) + p["pos_embedf"]

    def mix(x):                       # x: (B, C, T, H);  time -> channel -> patch
        b, c, t, h = x.shape
        xt = jnp.transpose(x, (3, 0, 1, 2)).reshape(h, b * c, t)
        xt = pallas_group_mixer(xt, p["t_w1"], p["t_b1"], p["t_w2"], p["t_b2"])
        x = jnp.transpose(xt.reshape(h, b, c, t), (1, 2, 3, 0))
        xc = jnp.transpose(x, (1, 0, 2, 3)).reshape(c, b * t, h)
        xc = pallas_group_mixer(xc, p["c_w1"], p["c_b1"], p["c_w2"], p["c_b2"])
        x = jnp.transpose(xc.reshape(c, b, t, h), (1, 0, 2, 3))
        xp = jnp.transpose(x, (2, 0, 1, 3)).reshape(t, b * c, h)
        xp = pallas_group_mixer(xp, p["p_w1"], p["p_b1"], p["p_w2"], p["p_b2"])
        x = jnp.transpose(xp.reshape(t, b, c, h), (1, 2, 0, 3))
        return x

    # --- time-domain branch --------------------------------------------------
    outputs = mix(z_embed).reshape(B, C, pnf * H)
    outputs = pallas_dense(outputs, p["lts_w"], p["lts_b"])      # (B, C, L)

    # --- frequency-domain branch ---------------------------------------------
    outputsf = mix(f_embed)
    f1 = pallas_dense(outputsf, p["breakn_w"], p["breakn_b"])    # (B, C, pnf, H)
    # breakn/head are applied twice to identical inputs in the reference model
    # (dropout inactive at inference) -> compute once and reuse.
    f1h = pallas_flatten_head(
        f1.reshape(B, C, pnf * H),
        p["h_w1"], p["h_b1"], p["h_w2"], p["h_b2"],
        p["h_w3"], p["h_b3"], p["h_w4"], p["h_b4"])              # (B, C, L)
    f2h = f1h

    # --- torch.fft.ifft(complex(f1, f2)) as one IDFT matmul ------------------
    ic = jnp.cos(ang) / L
    isn = jnp.sin(ang) / L
    w_ifft = jnp.concatenate(
        [jnp.concatenate([ic, isn], axis=1),
         jnp.concatenate([-isn, ic], axis=1)], axis=0)           # (2L, 2L)
    frfi = pallas_dense(jnp.concatenate([f1h, f2h], axis=-1), w_ifft,
                        jnp.zeros((2 * L,), jnp.float32))        # [Re | Im]
    outputsf = pallas_dense(frfi, p["dsd_w"], p["dsd_b"])        # (B, C, L)

    # --- merge branches, project, de-normalize -------------------------------
    outputs = pallas_dense(jnp.concatenate([outputs, outputsf], axis=-1),
                           p["dsd_w"], p["dsd_b"])               # (B, C, L)
    z_out = pallas_dense(outputs, p["wout_w"], p["wout_b"])      # (B, C, pred_len)
    return z_out * (z_std + 1e-4) + z_mean


# ---------------------------------------------------------------------------
# Pure-JAX reference (faithful transcription of the PyTorch forward)
# ---------------------------------------------------------------------------

def reference_forward(z, p, cfg):
    HIGH = jax.lax.Precision.HIGHEST
    gelu = functools.partial(jax.nn.gelu, approximate=False)
    dense = lambda x, w, b: jnp.dot(x, w, precision=HIGH) + b
    B, C, L = z.shape
    patch_len, stride = cfg.patch_len, cfg.stride
    pnf = int((L - patch_len) / stride + 1)
    H = cfg.d_model

    z_mean = jnp.mean(z, axis=-1, keepdims=True)
    z_std = jnp.std(z, axis=-1, keepdims=True, ddof=1)
    zn = (z - z_mean) / (z_std + 1e-4)

    zz = jnp.fft.fft(zn)
    z1, z2 = jnp.real(zz), jnp.imag(zz)
    idx = stride * jnp.arange(pnf)[:, None] + jnp.arange(patch_len)[None, :]
    f = dense(jnp.concatenate([z1[..., idx], z2[..., idx]], -1),
              p["seqdiv_w"], p["seqdiv_b"])
    zcube = zn[..., idx]
    z_embed = dense(zcube, p["proj_w"], p["proj_b"]) + p["pos_embedf"]
    f_embed = dense(f, p["proj_w"], p["proj_b"]) + p["pos_embedf"]

    def mix(x):
        h = gelu(jnp.einsum('bcth,hts->bcsh', x, p["t_w1"], precision=HIGH)
                 + p["t_b1"].T)
        x = jnp.einsum('bcsh,hso->bcoh', h, p["t_w2"], precision=HIGH) + p["t_b2"].T + x
        h = gelu(jnp.einsum('bcth,cho->bcto', x, p["c_w1"], precision=HIGH)
                 + p["c_b1"][None, :, None, :])
        x = jnp.einsum('bcto,cos->bcts', h, p["c_w2"], precision=HIGH) \
            + p["c_b2"][None, :, None, :] + x
        h = gelu(jnp.einsum('bcth,tho->bcto', x, p["p_w1"], precision=HIGH)
                 + p["p_b1"][None, None, :, :])
        x = jnp.einsum('bcto,tos->bcts', h, p["p_w2"], precision=HIGH) \
            + p["p_b2"][None, None, :, :] + x
        return x

    outputs = dense(mix(z_embed).reshape(B, C, pnf * H), p["lts_w"], p["lts_b"])
    outputsf = mix(f_embed)
    f1 = dense(outputsf, p["breakn_w"], p["breakn_b"])
    f2 = dense(outputsf, p["breakn_w"], p["breakn_b"])

    def head(x):
        x = x.reshape(B, C, pnf * H)
        x = gelu(dense(x, p["h_w1"], p["h_b1"])) + x
        x = gelu(dense(x, p["h_w2"], p["h_b2"])) + x
        x = gelu(dense(x, p["h_w3"], p["h_b3"])) + x
        return dense(x, p["h_w4"], p["h_b4"])

    f1h, f2h = head(f1), head(f2)
    ff = jnp.fft.ifft(f1h + 1j * f2h)
    fr, fi = jnp.real(ff), jnp.imag(ff)
    outputsf = dense(jnp.concatenate([fr, fi], -1), p["dsd_w"], p["dsd_b"])
    outputs = dense(jnp.concatenate([outputs, outputsf], -1), p["dsd_w"], p["dsd_b"])
    z_out = dense(outputs, p["wout_w"], p["wout_b"])
    return z_out * (z_std + 1e-4) + z_mean


# ---------------------------------------------------------------------------

if __name__ == "__main__":
    cfg = Config()
    key = jax.random.PRNGKey(0)
    kp, kz = jax.random.split(key)
    params = init_params(kp, cfg)

    B = 2
    z = jax.random.normal(kz, (B, cfg.enc_in, cfg.seq_len), jnp.float32)

    out = tfpmixer_forward(z, params, cfg)
    out = jax.block_until_ready(out)
    assert out.shape == (B, cfg.enc_in, cfg.pred_len)

    ref = jax.block_until_ready(reference_forward(z, params, cfg))
    assert jnp.all(jnp.isfinite(out))
    assert jnp.allclose(out, ref, rtol=2e-2, atol=2e-2), (
        f"max abs diff {float(jnp.max(jnp.abs(out - ref)))}")

    print("KERNEL_OK")
</pallas_src>

<mosaic_0001>
module attributes {stable_mosaic.version = 11 : i64} {
  func.func @_dense_kernel(%arg0: i32, %arg1: memref<8x16xf32, #tpu.memory_space<vmem>>, %arg2: memref<16x16xf32, #tpu.memory_space<vmem>>, %arg3: memref<1x16xf32, #tpu.memory_space<vmem>>, %arg4: memref<8x16xf32, #tpu.memory_space<vmem>>) attributes {dimension_semantics = [#tpu.dimension_semantics<parallel>], iteration_bounds = array<i64: 1>, scalar_prefetch = 0 : i64, scratch_operands = 0 : i64, tpu.core_type = #tpu.core_type<tc>, window_params = [{transform_indices = @transform_0, window_bounds = array<i64: 8, 16>}, {pipeline_mode = #tpu.pipeline_mode<synchronous>, transform_indices = @transform_1, window_bounds = array<i64: 16, 16>}, {pipeline_mode = #tpu.pipeline_mode<synchronous>, transform_indices = @transform_2, window_bounds = array<i64: 1, 16>}, {transform_indices = @transform_3, window_bounds = array<i64: 8, 16>}]} {
    %c0 = arith.constant 0 : index
    %c0_0 = arith.constant 0 : index
    %0 = vector.load %arg1[%c0, %c0_0] : memref<8x16xf32, #tpu.memory_space<vmem>>, vector<8x16xf32>
    %c0_1 = arith.constant 0 : index
    %c0_2 = arith.constant 0 : index
    %1 = vector.load %arg2[%c0_1, %c0_2] : memref<16x16xf32, #tpu.memory_space<vmem>>, vector<16x16xf32>
    %cst = arith.constant dense<0.000000e+00> : vector<8x16xf32>
    %2 = tpu.matmul %0, %1, %cst {dimension_numbers = #tpu.dot_dimension_numbers<[1], [0], [0], [1], [0, 0, 1, 1], [], []>} : vector<8x16xf32>, vector<16x16xf32>, vector<8x16xf32> -> vector<8x16xf32>
    %c0_3 = arith.constant 0 : index
    %c0_4 = arith.constant 0 : index
    %3 = vector.load %arg3[%c0_3, %c0_4] : memref<1x16xf32, #tpu.memory_space<vmem>>, vector<1x16xf32>
    %4 = vector.broadcast %3 : vector<1x16xf32> to vector<8x16xf32>
    %5 = arith.addf %2, %4 : vector<8x16xf32>
    %c0_5 = arith.constant 0 : index
    %c0_6 = arith.constant 0 : index
    %6 = vector.load %arg4[%c0_5, %c0_6] : memref<8x16xf32, #tpu.memory_space<vmem>>, vector<8x16xf32>
    tpu.vector_store %arg4[%c0_5, %c0_6], %5 {strides = array<i32>} : memref<8x16xf32, #tpu.memory_space<vmem>>, vector<8x16xf32>,
    return
  }
  func.func @transform_0(%arg0: i32) -> (i32, i32) {
    %c0_i32 = arith.constant 0 : i32
    %c0_i32_0 = arith.constant 0 : i32
    return %arg0, %c0_i32 : i32, i32
  }
  func.func @transform_1(%arg0: i32) -> (i32, i32) {
    %c0_i32 = arith.constant 0 : i32
    %c0_i32_0 = arith.constant 0 : i32
    %c0_i32_1 = arith.constant 0 : i32
    return %c0_i32, %c0_i32_0 : i32, i32
  }
  func.func @transform_2(%arg0: i32) -> (i32, i32) {
    %c0_i32 = arith.constant 0 : i32
    %c0_i32_0 = arith.constant 0 : i32
    %c0_i32_1 = arith.constant 0 : i32
    return %c0_i32, %c0_i32_0 : i32, i32
  }
  func.func @transform_3(%arg0: i32) -> (i32, i32) {
    %c0_i32 = arith.constant 0 : i32
    %c0_i32_0 = arith.constant 0 : i32
    return %arg0, %c0_i32 : i32, i32
  }
}

</mosaic_0001>

<llo_original>
// kernel: tpu_custom_call.1
$region0: #{tpu_custom_call.1}
  #allocation0 [shape = 'u32[]', space=smem, size = 0x4, offset = 0x4, fixed_abs, tag = 'smem constant byte address 0x4 - core index']
  #allocation1 [shape = 'u32[72,128]{1,0:T(1,128)}', space=vmem, size = 0x9000, scoped, tag = 'internal scratch']
  %s0 = inlined_call_operand.hbm [shape: f32[8,16], index: 0, kind: input, shape index: {}]
  %s1 = inlined_call_operand.hbm [shape: f32[16,16], index: 1, kind: input, shape index: {}]
  %s2 = inlined_call_operand.vmem [shape: f32[1,16], index: 2, kind: input, shape index: {}]
  %s3 = inlined_call_operand.hbm [shape: f32[8,16], index: 3, kind: output, shape index: {}]
  %s4 = sld [smem:[#allocation0]]
  $region30: #{tpu_custom_call.1} parent=0
    _
  %s6 = ssub.s32 1, %s4
  %s7 = scalar_select 0, %s6, %s4
  $region1: #{tpu_custom_call.1} parent=0
    #allocation2 [shape = 'u8[4096]{0}', space=vmem, size = 0x1000, scoped, tag = 'input window, operand 0, single buffered']
    #allocation3 [shape = 's32[1]{0}', space=sflag, size = 0x4, scoped, tag = 'scoped memory for tpu_custom_call.1']
    #allocation4 [shape = 's32[1]{0}', space=sflag, size = 0x4, scoped, tag = 'scoped memory for tpu_custom_call.1']
    #allocation5 [shape = 'u8[8192]{0}', space=vmem, size = 0x2000, scoped, tag = 'input window, operand 1, single buffered']
    #allocation6 [shape = 's32[1]{0}', space=sflag, size = 0x4, scoped, tag = 'scoped memory for tpu_custom_call.1']
    #allocation7 [shape = 'u8[4096]{0}', space=vmem, size = 0x1000, scoped, tag = 'output window, operand 0, single buffered']
    %8 = vsyncpa [#allocation3], 0
    %9 = vsyncpa [#allocation6], 0
    %10 = vsyncpa [#allocation4], 0
    // Predicated region
    $region2: #{tpu_custom_call.1} parent=1 // pred_check
      _
    $region3: #{tpu_custom_call.1} parent=1 // pred_check_branch
      %12 = sbr.rel (0) target = $region5
    $region4: #{tpu_custom_call.1} parent=1 // pred_region
      %14 = vsyncadd [#allocation3], 0
      %s16 = sshll.u32 %s0, 4
      %s17 = int_to_ptr.hbm [resolvable:$true] %s16
      %s18 = sshll.u32 [#allocation2], 4
      %s19 = int_to_ptr.vmem [resolvable:$true] %s18
      %21 = dma.hbm_to_vmem [thread:$0]  %s17, 128, %s19, [#allocation3]
    $region5: #{tpu_custom_call.1} parent=1 // pred_fallthru
      _
    // Predicated region
    $region6: #{tpu_custom_call.1} parent=1 // pred_check
      _
    $region7: #{tpu_custom_call.1} parent=1 // pred_check_branch
      %23 = sbr.rel (0) target = $region9
    $region8: #{tpu_custom_call.1} parent=1 // pred_region
      %25 = vsyncadd [#allocation6], 0
      %s26 = sshll.u32 %s1, 4
      %s27 = int_to_ptr.hbm [resolvable:$true] %s26
      %s28 = sshll.u32 [#allocation5], 4
      %s29 = int_to_ptr.vmem [resolvable:$true] %s28
      %34 = dma.hbm_to_vmem [thread:$0]  %s27, 256, %s29, [#allocation6], 128, 128, 8
    $region9: #{tpu_custom_call.1} parent=1 // pred_fallthru
      _
    // Predicated region
    $region10: #{tpu_custom_call.1} parent=1 // pred_check
      _
    $region11: #{tpu_custom_call.1} parent=1 // pred_check_branch
      %36 = sbr.rel (0) target = $region13
    $region12: #{tpu_custom_call.1} parent=1 // pred_region
      _
    $region13: #{tpu_custom_call.1} parent=1 // pred_fallthru
      _
    // Predicated region
    $region14: #{tpu_custom_call.1} parent=1 // pred_check
      _
    $region15: #{tpu_custom_call.1} parent=1 // pred_check_branch
      %38 = sbr.rel (0) target = $region17
    $region16: #{tpu_custom_call.1} parent=1 // pred_region
      %40 = dma.done [#allocation3], 128
    $region17: #{tpu_custom_call.1} parent=1 // pred_fallthru
      _
    // Predicated region
    $region18: #{tpu_custom_call.1} parent=1 // pred_check
      _
    $region19: #{tpu_custom_call.1} parent=1 // pred_check_branch
      %42 = sbr.rel (0) target = $region21
    $region20: #{tpu_custom_call.1} parent=1 // pred_region
      %44 = dma.done [#allocation6], 256
    $region21: #{tpu_custom_call.1} parent=1 // pred_fallthru
      _
    %v45 = vld [vmem:[#allocation2] sm:$0xff]
    %v46 = vld [vmem:[#allocation5] sm:$0xff]
    %v47 = vld [vmem:[#allocation5 + $0x8] sm:$0xff]
    %v48 = vld [vmem:[%s2] sm:$0x1]
    %v50 = vperm.slane %v48, 0
    %vm52 = vcmask 130048
    %v54 = vsel %vm52, %v45, 0
    %56 = vmatpush.msra.mxu0 0.0
    %57 = vmatpush.msra.mxu0 0.0
    %58 = vmatpush.msra.mxu0 0.0
    %59 = vmatpush.msra.mxu0 0.0
    %60 = vmatpush.msra.mxu0 0.0
    %61 = vmatpush.msra.mxu0 0.0
    %62 = vmatpush.msra.mxu0 0.0
    %63 = vmatpush.msra.mxu0 0.0
    %64 = vmatpush.msra.mxu0 0.0
    %65 = vmatpush.msra.mxu0 0.0
    %66 = vmatpush.msra.mxu0 0.0
    %67 = vmatpush.msra.mxu0 0.0
    %68 = vmatpush.msra.mxu0 0.0
    %69 = vmatpush.msra.mxu0 0.0
    %70 = vmatpush.msra.mxu0 %v47
    %71 = vmatpush.msra.mxu0 %v46
    %72 = vmatmul.f32.gmra.mxu0 %v54
    %v73 = vpop.f32.mrf.mxu0
    %v74 = vadd.f32 %v50, %v73
    %75 = vdwg.mxu0
    %76 = vst.msk [vmem:[#allocation7] sm:$0xff] %vm52, %v74
    // Predicated region
    $region22: #{tpu_custom_call.1} parent=1 // pred_check
      _
    $region23: #{tpu_custom_call.1} parent=1 // pred_check_branch
      %78 = sbr.rel (0) target = $region25
    $region24: #{tpu_custom_call.1} parent=1 // pred_region
      %80 = vsyncadd [#allocation4], 0
      %s82 = sshll.u32 [#allocation7], 4
      %s83 = int_to_ptr.vmem [resolvable:$true] %s82
      %s84 = sshll.u32 %s3, 4
      %s85 = int_to_ptr.hbm [resolvable:$true] %s84
      %87 = dma.vmem_to_hbm [thread:$0]  %s83, 128, %s85, [#allocation4]
    $region25: #{tpu_custom_call.1} parent=1 // pred_fallthru
      _
    // Predicated region
    $region26: #{tpu_custom_call.1} parent=1 // pred_check
      _
    $region27: #{tpu_custom_call.1} parent=1 // pred_check_branch
      %89 = sbr.rel (0) target = $region29
    $region28: #{tpu_custom_call.1} parent=1 // pred_region
      %91 = dma.done [#allocation4], 128
    $region29: #{tpu_custom_call.1} parent=1 // pred_fallthru
      _
    %92 = vsyncpa [#allocation3], 1
    %93 = vsyncpa [#allocation6], 1
    %94 = vsyncpa [#allocation4], 1

</llo_original>
